<compile_context>
chip_gen: v7x
topology: tpu7x:2x2x1
jax: 0.10.0
libtpu: 0.0.40
codegen_flags: <defaults>
</compile_context>

<pallas_src>
import numpy as np

import jax
import jax.numpy as jnp
from jax import lax
from jax.experimental import pallas as pl
from jax.experimental.pallas import tpu as pltpu


# ---------------------------------------------------------------------------
# Kernels
# ---------------------------------------------------------------------------

def _make_sa_matmul_kernel(C, HWp, nb):
    """Conv done as one MXU matmul against a precomputed banded matrix."""
    inv_c = 1.0 / float(C)

    def kernel(x_ref, m_ref, o_ref):
        # x_ref : VMEM (nb, C, HWp)
        # m_ref : VMEM (2*HWp, HWp) f32  rows [0:HWp) = max map, [HWp:) = avg map
        # o_ref : VMEM (nb, C, HWp)
        xf = x_ref[...].astype(jnp.float32)          # dies after the reductions
        mx = jnp.max(xf, axis=1)                     # (nb, HWp)
        av = jnp.sum(xf, axis=1) * inv_c             # (nb, HWp)

        acc = jnp.dot(mx, m_ref[0:HWp, :], preferred_element_type=jnp.float32)
        acc = acc + jnp.dot(av, m_ref[HWp:2 * HWp, :],
                            preferred_element_type=jnp.float32)   # (nb, HWp)

        # sigmoid = 1 / (1 + exp(-acc)); exp runs on the EUP.  approx=True on
        # the reciprocal would be cheaper still; kept exact to hold a 1e-5
        # match against the f32 reference.
        y = pl.reciprocal(1.0 + jnp.exp(-acc), approx=False)      # (nb, HWp)

        # Re-read x for the epilogue so the f32 slab is not live across the conv.
        o_ref[...] = (x_ref[...].astype(jnp.float32) * y[:, None, :]
                      ).astype(o_ref.dtype)

    return kernel


def _make_sa_roll_kernel(C, H, W, HWp, ks, nb):
    """Fallback conv for large HW: pltpu.roll taps + pre-broadcast 0/1 masks."""
    pad = (ks - 1) // 2
    inv_c = 1.0 / float(C)
    w_is_pow2 = (W & (W - 1)) == 0

    def kernel(w_ref, x_ref, o_ref):
        # w_ref : SMEM (2*ks*ks,) f32   conv weights, OIHW-flattened
        # x_ref : VMEM (nb, C, HWp)
        # o_ref : VMEM (nb, C, HWp)

        # Boundary masks: only 2*pad row masks + 2*pad col masks exist; build
        # them once per block as 0/1 f32 multiplicands pre-broadcast to the
        # (nb, HWp) compute shape (no per-tap re-broadcast / no selects).
        p = lax.broadcasted_iota(jnp.int32, (1, HWp), 1)           # p = h*W + w
        if w_is_pow2:
            col = jnp.bitwise_and(p, W - 1)
        else:
            pf = p.astype(jnp.float32)                 # exact for HWp < 2**24
            col = (pf - jnp.floor(pf * (1.0 / W)) * W).astype(jnp.int32)

        def _bcast(m_bool):
            return jnp.broadcast_to(m_bool.astype(jnp.float32), (nb, HWp))

        row_m = {0: None}
        col_m = {0: None}
        for o in range(1, pad + 1):
            row_m[o] = _bcast(p < (H - o) * W)         # source row h+o < H
            row_m[-o] = _bcast(p >= o * W)             # source row h-o >= 0
            col_m[o] = _bcast(col < (W - o))           # source col w+o < W
            col_m[-o] = _bcast(col >= o)               # source col w-o >= 0

        # All SMEM scalar weight reads hoisted out of the tap loops.
        w_mx = [[w_ref[dh * ks + dw] for dw in range(ks)] for dh in range(ks)]
        w_av = [[w_ref[ks * ks + dh * ks + dw] for dw in range(ks)]
                for dh in range(ks)]

        # Channel pooling, vectorized over the whole batch block.
        xf = x_ref[...].astype(jnp.float32)            # dies after reductions
        mx = jnp.max(xf, axis=1)                       # (nb, HWp)
        av = jnp.sum(xf, axis=1) * inv_c               # (nb, HWp)

        # 'same' ks x ks conv as statically-shifted taps: a spatial shift
        # (oh, ow) of the flattened maps is one XLU lane rotation by oh*W+ow,
        # with the 0/1 row/col masks supplying the zero padding.
        acc = None
        for dh in range(ks):
            oh = dh - pad
            racc = None
            for dw in range(ks):
                ow = dw - pad
                shift = (-(oh * W + ow)) % HWp         # shifted[p]=pool[p+off]
                if shift == 0:
                    mx_s, av_s = mx, av
                else:
                    mx_s = pltpu.roll(mx, shift, axis=1)
                    av_s = pltpu.roll(av, shift, axis=1)
                t = w_mx[dh][dw] * mx_s + w_av[dh][dw] * av_s
                if col_m[ow] is not None:
                    t = t * col_m[ow]
                racc = t if racc is None else racc + t
            if row_m[oh] is not None:
                racc = racc * row_m[oh]
            acc = racc if acc is None else acc + racc

        y = pl.reciprocal(1.0 + jnp.exp(-acc), approx=False)       # (nb, HWp)
        o_ref[...] = (x_ref[...].astype(jnp.float32) * y[:, None, :]
                      ).astype(o_ref.dtype)

    return kernel


# ---------------------------------------------------------------------------
# Wrapper helpers
# ---------------------------------------------------------------------------

def _vmem_capacity_bytes():
    try:
        return int(pltpu.get_tpu_info().vmem_capacity_bytes)
    except Exception:
        return 64 << 20             # conservative (v7x-sized) assumption


def _pick_nb(N, per_batch_bytes, target_block_bytes, want_two_steps):
    """Batch elements per grid step: as big as the block budget allows, an
    exact divisor of N, and (on 2-TC chips) >= 2 grid steps, even if possible."""
    nb = int(max(1, min(N, target_block_bytes // max(per_batch_bytes, 1))))
    if want_two_steps and N >= 2:
        nb = min(nb, N // 2)                         # at least two grid steps
    nb = max(nb, 1)
    while N % nb:
        nb -= 1
    if want_two_steps and nb > 1 and (N // nb) % 2:
        cand = nb - 1                                # prefer an even step count
        while cand >= 1:
            if N % cand == 0 and (N // cand) % 2 == 0:
                nb = cand
                break
            cand -= 1
    return nb


def _build_conv_matrix(conv_weight, H, W, HWp):
    """Banded (2*HWp, HWp) matrix M with the 'same'-conv boundary zeros (and
    lane-padding zeros) baked in, such that for flattened pooled maps
    y = mx @ M[:HWp] + av @ M[HWp:].  Index sets are static numpy; only the
    ks*ks weight values are traced, so this stays jit-compatible."""
    ks = int(conv_weight.shape[-1])
    pad = (ks - 1) // 2
    w = conv_weight.reshape(2, ks, ks).astype(jnp.float32)
    m = jnp.zeros((2, HWp, HWp), dtype=jnp.float32)
    for dh in range(ks):
        for dw in range(ks):
            oh, ow = dh - pad, dw - pad
            hs = np.arange(max(0, -oh), min(H, H - oh))
            ws = np.arange(max(0, -ow), min(W, W - ow))
            if hs.size == 0 or ws.size == 0:
                continue
            hh, ww = np.meshgrid(hs, ws, indexing="ij")
            p_dst = (hh * W + ww).ravel()
            p_src = ((hh + oh) * W + (ww + ow)).ravel()
            m = m.at[0, p_src, p_dst].add(w[0, dh, dw])
            m = m.at[1, p_src, p_dst].add(w[1, dh, dw])
    return m.reshape(2 * HWp, HWp)


# ---------------------------------------------------------------------------
# Public entry point
# ---------------------------------------------------------------------------

def sa_layer(x, conv_weight, *, conv_mode="auto", donate_x=False):
    """SALayer forward.  x: (N, C, H, W); conv_weight: (1, 2, ks, ks)."""
    N, C, H, W = x.shape
    ks = int(conv_weight.shape[-1])
    HW = H * W
    HWp = ((HW + 127) // 128) * 128                 # lane-dense last axis

    # Flatten spatial dims (free contiguous reshape); pad to a lane multiple.
    x_flat = x.reshape(N, C, HW)
    if HWp != HW:
        x_flat = jnp.pad(x_flat, ((0, 0), (0, 0), (0, HWp - HW)))

    # ---- per-generation tiling knobs -------------------------------------
    vmem_cap = _vmem_capacity_bytes()
    two_tensorcores = vmem_cap <= (64 << 20)        # v7x: 64 MiB VMEM, 2 TCs
    if two_tensorcores:
        target_block_bytes = 4 << 20
        vmem_limit_cap = 48 << 20                   # headroom under 64 MiB
    else:                                           # v5e / v6e: 128 MiB VMEM
        target_block_bytes = 8 << 20
        vmem_limit_cap = 64 << 20

    itemsize = jnp.dtype(x.dtype).itemsize
    per_batch_bytes = C * HWp * itemsize
    nb = _pick_nb(N, per_batch_bytes, target_block_bytes, two_tensorcores)
    grid = (N // nb,)
    # TODO(synk): halo-tiled spatial row bands for single images too large to
    # double-buffer in VMEM (needs a (ks-1)//2-row halo at band seams).

    # ---- conv path selection ----------------------------------------------
    matrix_bytes = 2 * HWp * HWp * 4
    if conv_mode == "auto":
        use_matmul = matrix_bytes <= (8 << 20)      # HWp <= ~1K
    elif conv_mode == "matmul":
        use_matmul = True
    elif conv_mode == "roll":
        use_matmul = False
    else:
        raise ValueError(f"unknown conv_mode: {conv_mode!r}")

    # Scoped-VMEM limit: double-buffered in+out blocks + conv matrix + an f32
    # working copy, clamped to the per-generation cap; always >= 32 MiB so the
    # v5e 16 MiB default never gates block size.
    inflight = 4 * nb * per_batch_bytes + nb * C * HWp * 4
    if use_matmul:
        inflight += 2 * matrix_bytes
    vmem_limit = int(min(vmem_limit_cap, max(32 << 20, 2 * inflight)))

    compiler_params = pltpu.CompilerParams(
        dimension_semantics=("parallel",),
        vmem_limit_bytes=vmem_limit)

    out_shape = jax.ShapeDtypeStruct((N, C, HWp), x.dtype)

    if use_matmul:
        conv_mat = _build_conv_matrix(conv_weight, H, W, HWp)
        grid_spec = pltpu.PrefetchScalarGridSpec(
            num_scalar_prefetch=0,
            grid=grid,
            in_specs=[pl.BlockSpec((nb, C, HWp), lambda n: (n, 0, 0)),
                      pl.BlockSpec((2 * HWp, HWp), lambda n: (0, 0))],
            out_specs=pl.BlockSpec((nb, C, HWp), lambda n: (n, 0, 0)))
        out_flat = pl.pallas_call(
            _make_sa_matmul_kernel(C, HWp, nb),
            out_shape=out_shape,
            grid_spec=grid_spec,
            compiler_params=compiler_params,
            input_output_aliases={0: 0} if donate_x else {},
        )(x_flat, conv_mat)
    else:
        if (W & (W - 1)) != 0:
            # Float-trick column index in the kernel is exact only below 2**24.
            assert HWp < (1 << 24), "spatial extent too large for roll path"
        w_flat = conv_weight.reshape(-1).astype(jnp.float32)       # (2*ks*ks,)
        grid_spec = pltpu.PrefetchScalarGridSpec(
            num_scalar_prefetch=1,                   # conv weights -> SMEM
            grid=grid,
            in_specs=[pl.BlockSpec((nb, C, HWp), lambda n, w_smem: (n, 0, 0))],
            out_specs=pl.BlockSpec((nb, C, HWp), lambda n, w_smem: (n, 0, 0)))
        out_flat = pl.pallas_call(
            _make_sa_roll_kernel(C, H, W, HWp, ks, nb),
            out_shape=out_shape,
            grid_spec=grid_spec,
            compiler_params=compiler_params,
            input_output_aliases={1: 0} if donate_x else {},
        )(w_flat, x_flat)

    out = out_flat
    if HWp != HW:
        out = out[..., :HW]
    return out.reshape(N, C, H, W)


def sa_layer_ref(x, conv_weight):
    """Pure-JAX reference mirroring the PyTorch forward."""
    mx = jnp.max(x, axis=1, keepdims=True)
    av = jnp.mean(x, axis=1, keepdims=True)
    pool = jnp.concatenate([mx, av], axis=1)                      # (N,2,H,W)
    pad = (conv_weight.shape[-1] - 1) // 2
    y = lax.conv_general_dilated(
        pool, conv_weight,
        window_strides=(1, 1),
        padding=[(pad, pad), (pad, pad)],
        dimension_numbers=("NCHW", "OIHW", "NCHW"))
    return x * jax.nn.sigmoid(y)


if __name__ == "__main__":
    key = jax.random.PRNGKey(0)
    kx, kw = jax.random.split(key)

    N, C, H, W = 2, 4, 16, 16
    ks = 5

    x = jax.random.normal(kx, (N, C, H, W), dtype=jnp.float32)
    # Deterministic synthetic conv weight (PyTorch shape: out=1, in=2, ks, ks)
    conv_weight = 0.1 * jax.random.normal(kw, (1, 2, ks, ks), dtype=jnp.float32)

    ref = jax.block_until_ready(sa_layer_ref(x, conv_weight))

    # Primary path: conv as a single MXU matmul against the banded matrix.
    out = jax.block_until_ready(sa_layer(x, conv_weight))
    assert out.shape == (N, C, H, W)
    assert jnp.allclose(out, ref, atol=1e-5, rtol=1e-5)

    # Large-HW fallback path: batch-vectorized roll/mask conv.
    out_roll = jax.block_until_ready(sa_layer(x, conv_weight, conv_mode="roll"))
    assert jnp.allclose(out_roll, ref, atol=1e-5, rtol=1e-5)

    print("KERNEL_OK")
</pallas_src>

<mosaic_0001>
module attributes {stable_mosaic.version = 11 : i64} {
  func.func @kernel(%arg0: i32, %arg1: memref<1x4x256xf32, #tpu.memory_space<vmem>>, %arg2: memref<512x256xf32, #tpu.memory_space<vmem>>, %arg3: memref<1x4x256xf32, #tpu.memory_space<vmem>>) attributes {dimension_semantics = [#tpu.dimension_semantics<parallel>], iteration_bounds = array<i64: 2>, scalar_prefetch = 0 : i64, scratch_operands = 0 : i64, tpu.core_type = #tpu.core_type<tc>, window_params = [{transform_indices = @transform_0, window_bounds = array<i64: 1, 4, 256>}, {pipeline_mode = #tpu.pipeline_mode<synchronous>, transform_indices = @transform_1, window_bounds = array<i64: 512, 256>}, {transform_indices = @transform_2, window_bounds = array<i64: 1, 4, 256>}]} {
    %c0 = arith.constant 0 : index
    %c0_0 = arith.constant 0 : index
    %c0_1 = arith.constant 0 : index
    %0 = vector.load %arg1[%c0, %c0_0, %c0_1] : memref<1x4x256xf32, #tpu.memory_space<vmem>>, vector<1x4x256xf32>
    %cst = arith.constant dense<0xFF800000> : vector<1x256xf32>
    %1 = vector.multi_reduction <maximumf>, %0, %cst [1] : vector<1x4x256xf32> to vector<1x256xf32>
    %cst_2 = arith.constant dense<0.000000e+00> : vector<1x256xf32>
    %2 = vector.multi_reduction <add>, %0, %cst_2 [1] : vector<1x4x256xf32> to vector<1x256xf32>
    %cst_3 = arith.constant 2.500000e-01 : f32
    %3 = vector.broadcast %cst_3 : f32 to vector<1x256xf32>
    %4 = arith.mulf %2, %3 : vector<1x256xf32>
    %c0_4 = arith.constant 0 : index
    %c0_5 = arith.constant 0 : index
    %5 = vector.load %arg2[%c0_4, %c0_5] : memref<512x256xf32, #tpu.memory_space<vmem>>, vector<256x256xf32>
    %cst_6 = arith.constant dense<0.000000e+00> : vector<1x256xf32>
    %6 = tpu.matmul %1, %5, %cst_6 {dimension_numbers = #tpu.dot_dimension_numbers<[1], [0], [0], [1], [0, 0, 1, 1], [], []>} : vector<1x256xf32>, vector<256x256xf32>, vector<1x256xf32> -> vector<1x256xf32>
    %c256 = arith.constant 256 : index
    %c0_7 = arith.constant 0 : index
    %7 = vector.load %arg2[%c256, %c0_7] : memref<512x256xf32, #tpu.memory_space<vmem>>, vector<256x256xf32>
    %cst_8 = arith.constant dense<0.000000e+00> : vector<1x256xf32>
    %8 = tpu.matmul %4, %7, %cst_8 {dimension_numbers = #tpu.dot_dimension_numbers<[1], [0], [0], [1], [0, 0, 1, 1], [], []>} : vector<1x256xf32>, vector<256x256xf32>, vector<1x256xf32> -> vector<1x256xf32>
    %9 = arith.addf %6, %8 : vector<1x256xf32>
    %cst_9 = arith.constant 0.000000e+00 : f32
    %10 = vector.broadcast %cst_9 : f32 to vector<1x256xf32>
    %11 = arith.subf %10, %9 : vector<1x256xf32>
    %12 = math.exp %11 : vector<1x256xf32>
    %cst_10 = arith.constant 1.000000e+00 : f32
    %13 = vector.broadcast %cst_10 : f32 to vector<1x256xf32>
    %14 = arith.addf %13, %12 : vector<1x256xf32>
    %15 = tpu.reciprocal %14 : vector<1x256xf32> -> vector<1x256xf32>
    %c0_11 = arith.constant 0 : index
    %c0_12 = arith.constant 0 : index
    %c0_13 = arith.constant 0 : index
    %16 = vector.load %arg1[%c0_11, %c0_12, %c0_13] : memref<1x4x256xf32, #tpu.memory_space<vmem>>, vector<1x4x256xf32>
    %17 = vector.shape_cast %15 : vector<1x256xf32> to vector<1x1x256xf32>
    %18 = vector.broadcast %17 : vector<1x1x256xf32> to vector<1x4x256xf32>
    %19 = arith.mulf %16, %18 : vector<1x4x256xf32>
    %c0_14 = arith.constant 0 : index
    %c0_15 = arith.constant 0 : index
    %c0_16 = arith.constant 0 : index
    %20 = vector.load %arg3[%c0_14, %c0_15, %c0_16] : memref<1x4x256xf32, #tpu.memory_space<vmem>>, vector<1x4x256xf32>
    tpu.vector_store %arg3[%c0_14, %c0_15, %c0_16], %19 {strides = array<i32>} : memref<1x4x256xf32, #tpu.memory_space<vmem>>, vector<1x4x256xf32>,
    return
  }
  func.func @transform_0(%arg0: i32) -> (i32, i32, i32) {
    %c0_i32 = arith.constant 0 : i32
    %c0_i32_0 = arith.constant 0 : i32
    %c0_i32_1 = arith.constant 0 : i32
    return %arg0, %c0_i32, %c0_i32_0 : i32, i32, i32
  }
  func.func @transform_1(%arg0: i32) -> (i32, i32) {
    %c0_i32 = arith.constant 0 : i32
    %c0_i32_0 = arith.constant 0 : i32
    %c0_i32_1 = arith.constant 0 : i32
    return %c0_i32, %c0_i32_0 : i32, i32
  }
  func.func @transform_2(%arg0: i32) -> (i32, i32, i32) {
    %c0_i32 = arith.constant 0 : i32
    %c0_i32_0 = arith.constant 0 : i32
    %c0_i32_1 = arith.constant 0 : i32
    return %arg0, %c0_i32, %c0_i32_0 : i32, i32, i32
  }
}

</mosaic_0001>

<llo_original>
// kernel: tpu_custom_call.1
$region0: #{tpu_custom_call.1}
  #allocation0 [shape = 'u32[]', space=smem, size = 0x4, offset = 0x4, fixed_abs, tag = 'smem constant byte address 0x4 - core index']
  #allocation1 [shape = 'u32[144,128]{1,0:T(1,128)}', space=vmem, size = 0x12000, scoped, tag = 'internal scratch']
  %s0 = inlined_call_operand.hbm [shape: f32[2,4,256], index: 0, kind: input, shape index: {}]
  %s1 = inlined_call_operand.hbm [shape: f32[512,256], index: 1, kind: input, shape index: {}]
  %s2 = inlined_call_operand.hbm [shape: f32[2,4,256], index: 2, kind: output, shape index: {}]
  %s3 = sld [smem:[#allocation0]]
  $region49: #{tpu_custom_call.1} parent=0
    _
  %s5 = ssub.s32 1, %s3
  %s6 = scalar_select 0, %s5, %s3
  $region1: #{tpu_custom_call.1} parent=0
    #allocation2 [shape = 'u8[8192]{0}', space=vmem, size = 0x2000, scoped, tag = 'input window, operand 0']
    #allocation3 [shape = 's32[2]{0}', space=sflag, size = 0x8, scoped, tag = 'scoped memory for tpu_custom_call.1']
    #allocation4 [shape = 's32[2]{0}', space=sflag, size = 0x8, scoped, tag = 'scoped memory for tpu_custom_call.1']
    #allocation5 [shape = 'u8[524288]{0}', space=vmem, size = 0x80000, scoped, tag = 'input window, operand 1, single buffered']
    #allocation6 [shape = 's32[1]{0}', space=sflag, size = 0x4, scoped, tag = 'scoped memory for tpu_custom_call.1']
    #allocation7 [shape = 'u8[8192]{0}', space=vmem, size = 0x2000, scoped, tag = 'output window, operand 0']
    %7 = vsyncpa [#allocation3], 0
    %s8 = scalar_lea.sflag [#allocation3], 1
    %9 = vsyncpa %s8, 0
    %10 = vsyncpa [#allocation6], 0
    %11 = vsyncpa [#allocation4], 0
    %s12 = scalar_lea.sflag [#allocation4], 1
    %13 = vsyncpa %s12, 0
    loop: start=0, step=1, limit=4
    $region2: #{tpu_custom_call.1} parent=1 // loop_pre_header
      _
    $region3: #{tpu_custom_call.1} parent=1 // loop_header
      %s15 = sphi 0, %s19
      %p16 = scmp.ge.s32.totalorder %s15, 4
      %s25 = sphi 0, %s27
      %s28 = sphi 0, %s25
      %s29 = sphi 0, %s28
      %s45 = sphi 0, %s29
      %s49 = sphi 0, %s49
      %s51 = sphi 0, %s49
      %s52 = sphi 0, %s51
      %s66 = sphi 0, %s52
      %s72 = sphi 0, %s74
      %s75 = sphi 0, %s72
      %s76 = sphi 0, %s75
      %s92 = sphi 0, %s76
    $region4: #{tpu_custom_call.1} parent=1 // loop_header_branch
      %18 = sbr.rel (%p16) target = $region8
    $region5: #{tpu_custom_call.1} parent=1 // loop_body
      %s20 = ssub.s32 %s15, 1
      %s21 = ssub.s32 %s15, 2
      %s22 = sadd.s32 %s15, 1
      %s23 = ssub.s32 %s15, %s22
      %p24 = scmp.eq.s32.totalorder %s23, 0
      %s26 = sadd.s32 %s25, 1
      %s27 = scalar_select %p24, %s25, %s26
      %p30 = pneg %p24
      %p31 = scmp.eq.s32.totalorder %s15, 1
      %p32 = por %p30, %p31
      %p33 = scmp.ne.s32.totalorder %s25, %s28
      %p34 = scmp.eq.s32.totalorder %s15, 0
      %p35 = por %p33, %p34
      %p36 = scmp.ne.s32.totalorder %s25, %s28
      %p37 = scmp.eq.s32.totalorder %s20, 1
      %p38 = por %p36, %p37
      %p39 = scmp.ne.s32.totalorder %s28, %s29
      %p40 = scmp.eq.s32.totalorder %s20, 0
      %p41 = por %p39, %p40
      %p42 = scmp.ne.s32.totalorder %s28, %s29
      %p43 = scmp.eq.s32.totalorder %s21, 1
      %p44 = por %p42, %p43
      %p46 = scmp.ne.s32.totalorder %s29, %s45
      %p47 = scmp.eq.s32.totalorder %s21, 0
      %p48 = por %p46, %p47
      %s50 = sadd.s32 %s49, 1
      %p53 = scmp.eq.s32.totalorder %s15, 1
      %p54 = scmp.ne.s32.totalorder %s49, %s51
      %p55 = scmp.eq.s32.totalorder %s15, 0
      %p56 = por %p54, %p55
      %p57 = scmp.ne.s32.totalorder %s49, %s51
      %p58 = scmp.eq.s32.totalorder %s20, 1
      %p59 = por %p57, %p58
      %p60 = scmp.ne.s32.totalorder %s51, %s52
      %p61 = scmp.eq.s32.totalorder %s20, 0
      %p62 = por %p60, %p61
      %p63 = scmp.ne.s32.totalorder %s51, %s52
      %p64 = scmp.eq.s32.totalorder %s21, 1
      %p65 = por %p63, %p64
      %p67 = scmp.ne.s32.totalorder %s52, %s66
      %p68 = scmp.eq.s32.totalorder %s21, 0
      %p69 = por %p67, %p68
      %s70 = ssub.s32 %s15, %s22
      %p71 = scmp.eq.s32.totalorder %s70, 0
      %s73 = sadd.s32 %s72, 1
      %s74 = scalar_select %p71, %s72, %s73
      %p77 = pneg %p71
      %p78 = scmp.eq.s32.totalorder %s15, 1
      %p79 = por %p77, %p78
      %p80 = scmp.ne.s32.totalorder %s72, %s75
      %p81 = scmp.eq.s32.totalorder %s15, 0
      %p82 = por %p80, %p81
      %p83 = scmp.ne.s32.totalorder %s72, %s75
      %p84 = scmp.eq.s32.totalorder %s20, 1
      %p85 = por %p83, %p84
      %p86 = scmp.ne.s32.totalorder %s75, %s76
      %p87 = scmp.eq.s32.totalorder %s20, 0
      %p88 = por %p86, %p87
      %p89 = scmp.ne.s32.totalorder %s75, %s76
      %p90 = scmp.eq.s32.totalorder %s21, 1
      %p91 = por %p89, %p90
      %p93 = scmp.ne.s32.totalorder %s76, %s92
      %p94 = scmp.eq.s32.totalorder %s21, 0
      %p95 = por %p93, %p94
      %p96 = scmp.le.s32.totalorder 1, %s15
      %p97 = scmp.lt.s32.totalorder %s15, 3
      %p98 = pnand %p96, %p97
      %p99 = pneg %p98
      // Predicated region
      $region9: #{tpu_custom_call.1} parent=5 // pred_check
        _
      $region10: #{tpu_custom_call.1} parent=5 // pred_check_branch
        %101 = sbr.rel (%p98) target = $region12
      $region11: #{tpu_custom_call.1} parent=5 // pred_region
        %s102 = ssub.s32 %s15, 1
        // Predicated region
        $region13: #{tpu_custom_call.1} parent=11 // pred_check
          %p103 = pneg %p62
        $region14: #{tpu_custom_call.1} parent=11 // pred_check_branch
          %105 = sbr.rel (%p103) target = $region16
        $region15: #{tpu_custom_call.1} parent=11 // pred_region
          %s107 = ssub.s32 16384, 16384
          %108 = vsyncadd [#allocation6], %s107
          %s109 = sshll.u32 [#allocation5], 4
          %s110 = int_to_ptr.vmem [resolvable:$true] %s109
          %115 = dma.hbm_to_vmem [thread:$0]  %s1, 16384, %s110, [#allocation6], 256, 256, 16
        $region16: #{tpu_custom_call.1} parent=11 // pred_fallthru
          _
      $region12: #{tpu_custom_call.1} parent=5 // pred_fallthru
        _
      %p116 = scmp.lt.s32.totalorder %s15, 2
      // Predicated region
      $region17: #{tpu_custom_call.1} parent=5 // pred_check
        %p117 = pneg %p116
      $region18: #{tpu_custom_call.1} parent=5 // pred_check_branch
        %119 = sbr.rel (%p117) target = $region20
      $region19: #{tpu_custom_call.1} parent=5 // pred_region
        // Predicated region
        $region21: #{tpu_custom_call.1} parent=19 // pred_check
          %p120 = pneg %p35
        $region22: #{tpu_custom_call.1} parent=19 // pred_check_branch
          %122 = sbr.rel (%p120) target = $region24
        $region23: #{tpu_custom_call.1} parent=19 // pred_region
          %s123 = sand.u32 %s25, 1
          %s124 = scalar_lea.sflag [#allocation3], %s123
          %s125 = sand.u32 %s25, 1
          %s126 = smul.addr %s125, 8
          %s127 = scalar_lea.vmem [#allocation2], %s126
          %s129 = ssub.s32 128, 128
          %130 = vsyncadd %s124, %s129
          %s131 = smul.addr %s15, 2
          %s132 = smul.addr %s131, 64
          %s133 = scalar_lea.hbm %s0, %s132
          %s135 = sshll.u32 %s127, 4
          %s136 = int_to_ptr.vmem [resolvable:$true] %s135
          %138 = dma.hbm_to_vmem [thread:$0]  %s133, 128, %s136, %s124
        $region24: #{tpu_custom_call.1} parent=19 // pred_fallthru
          _
      $region20: #{tpu_custom_call.1} parent=5 // pred_fallthru
        _
      %p139 = scmp.le.s32.totalorder 1, %s15
      %p140 = scmp.lt.s32.totalorder %s15, 3
      %p141 = pnand %p139, %p140
      %p142 = pneg %p141
      // Predicated region
      $region25: #{tpu_custom_call.1} parent=5 // pred_check
        _
      $region26: #{tpu_custom_call.1} parent=5 // pred_check_branch
        %144 = sbr.rel (%p141) target = $region28
      $region27: #{tpu_custom_call.1} parent=5 // pred_region
        %s145 = ssub.s32 %s15, 1
        %s146 = sand.u32 %s28, 1
        %s147 = scalar_lea.sflag [#allocation3], %s146
        %s148 = sand.u32 %s28, 1
        %s149 = smul.addr %s148, 8
        %s150 = scalar_lea.vmem [#allocation2], %s149
        // Predicated region
        $region29: #{tpu_custom_call.1} parent=27 // pred_check
          %p151 = pneg %p41
        $region30: #{tpu_custom_call.1} parent=27 // pred_check_branch
          %153 = sbr.rel (%p151) target = $region32
        $region31: #{tpu_custom_call.1} parent=27 // pred_region
          %154 = dma.done %s147, 128
        $region32: #{tpu_custom_call.1} parent=27 // pred_fallthru
          _
        // Predicated region
        $region33: #{tpu_custom_call.1} parent=27 // pred_check
          %p155 = pneg %p62
        $region34: #{tpu_custom_call.1} parent=27 // pred_check_branch
          %157 = sbr.rel (%p155) target = $region36
        $region35: #{tpu_custom_call.1} parent=27 // pred_region
          %158 = dma.done [#allocation6], 16384
        $region36: #{tpu_custom_call.1} parent=27 // pred_fallthru
          _
        %s159 = sand.u32 %s28, 1
        %s160 = scalar_lea.sflag [#allocation3], %s159
        %s161 = sand.u32 %s28, 1
        %s162 = smul.addr %s161, 8
        %s163 = scalar_lea.vmem [#allocation2], %s162
        %p164 = pneg %p41
        %p165 = pneg %p38
        %p166 = pneg %p62
        %p167 = pneg %p59
        %p168 = pneg %p88
        %p169 = pneg %p85
        %s170 = sand.u32 %s75, 1
        %s171 = scalar_lea.sflag [#allocation4], %s170
        %s172 = sand.u32 %s75, 1
        %s173 = smul.addr %s172, 8
        %s174 = scalar_lea.vmem [#allocation7], %s173
        %v175 = vld [vmem:[%s150] sm:$0xff]
        %v177 = vcombine.high %v175, %v175
        %vm179 = vcmask 1043456
        %v180 = vsel %vm179, %v175, -inf
        %v181 = vrot.slane %v180, 4
        %v182 = vmax.f32 %v180, %v181
        %v183 = vrot.slane %v182, 2
        %v184 = vmax.f32 %v182, %v183
        %v185 = vrot.slane %v184, 1
        %v186 = vmax.f32 %v184, %v185
        %v187 = vsel %vm179, %v177, -inf
        %v188 = vrot.slane %v187, 4
        %v189 = vmax.f32 %v187, %v188
        %v190 = vrot.slane %v189, 2
        %v191 = vmax.f32 %v189, %v190
        %v192 = vrot.slane %v191, 1
        %v193 = vmax.f32 %v191, %v192
        %v194 = vsel %vm179, %v175, 0.0
        %v195 = vrot.slane %v194, 4
        %v196 = vadd.f32 %v194, %v195
        %v197 = vrot.slane %v196, 2
        %v198 = vadd.f32 %v196, %v197
        %v199 = vrot.slane %v198, 1
        %v200 = vadd.f32 %v198, %v199
        %v201 = vsel %vm179, %v177, 0.0
        %v202 = vrot.slane %v201, 4
        %v203 = vadd.f32 %v201, %v202
        %v204 = vrot.slane %v203, 2
        %v205 = vadd.f32 %v203, %v204
        %v206 = vrot.slane %v205, 1
        %v207 = vadd.f32 %v205, %v206
        %v208 = vmul.f32 %v200, 0.25
        %v209 = vmul.f32 %v207, 0.25
        %v210 = vld [vmem:[#allocation5] sm:$0xff]
        %v211 = vld [vmem:[#allocation5 + $0x8] sm:$0xff]
        %v212 = vld [vmem:[#allocation5 + $0x10] sm:$0xff]
        %v213 = vld [vmem:[#allocation5 + $0x18] sm:$0xff]
        %v214 = vld [vmem:[#allocation5 + $0x20] sm:$0xff]
        %v215 = vld [vmem:[#allocation5 + $0x28] sm:$0xff]
        %v216 = vld [vmem:[#allocation5 + $0x30] sm:$0xff]
        %v217 = vld [vmem:[#allocation5 + $0x38] sm:$0xff]
        %v218 = vld [vmem:[#allocation5 + $0x40] sm:$0xff]
        %v219 = vld [vmem:[#allocation5 + $0x48] sm:$0xff]
        %v220 = vld [vmem:[#allocation5 + $0x50] sm:$0xff]
        %v221 = vld [vmem:[#allocation5 + $0x58] sm:$0xff]
        %v222 = vld [vmem:[#allocation5 + $0x60] sm:$0xff]
        %v223 = vld [vmem:[#allocation5 + $0x68] sm:$0xff]
        %v224 = vld [vmem:[#allocation5 + $0x70] sm:$0xff]
        %v225 = vld [vmem:[#allocation5 + $0x78] sm:$0xff]
        %v226 = vld [vmem:[#allocation5 + $0x80] sm:$0xff]
        %v227 = vld [vmem:[#allocation5 + $0x88] sm:$0xff]
        %v228 = vld [vmem:[#allocation5 + $0x90] sm:$0xff]
        %v229 = vld [vmem:[#allocation5 + $0x98] sm:$0xff]
        %v230 = vld [vmem:[#allocation5 + $0xa0] sm:$0xff]
        %v231 = vld [vmem:[#allocation5 + $0xa8] sm:$0xff]
        %v232 = vld [vmem:[#allocation5 + $0xb0] sm:$0xff]
        %v233 = vld [vmem:[#allocation5 + $0xb8] sm:$0xff]
        %v234 = vld [vmem:[#allocation5 + $0xc0] sm:$0xff]
        %v235 = vld [vmem:[#allocation5 + $0xc8] sm:$0xff]
        %v236 = vld [vmem:[#allocation5 + $0xd0] sm:$0xff]
        %v237 = vld [vmem:[#allocation5 + $0xd8] sm:$0xff]
        %v238 = vld [vmem:[#allocation5 + $0xe0] sm:$0xff]
        %v239 = vld [vmem:[#allocation5 + $0xe8] sm:$0xff]
        %v240 = vld [vmem:[#allocation5 + $0xf0] sm:$0xff]
        %v241 = vld [vmem:[#allocation5 + $0xf8] sm:$0xff]
        %v242 = vld [vmem:[#allocation5 + $0x100] sm:$0xff]
        %v243 = vld [vmem:[#allocation5 + $0x108] sm:$0xff]
        %v244 = vld [vmem:[#allocation5 + $0x110] sm:$0xff]
        %v245 = vld [vmem:[#allocation5 + $0x118] sm:$0xff]
        %v246 = vld [vmem:[#allocation5 + $0x120] sm:$0xff]
        %v247 = vld [vmem:[#allocation5 + $0x128] sm:$0xff]
        %v248 = vld [vmem:[#allocation5 + $0x130] sm:$0xff]
        %v249 = vld [vmem:[#allocation5 + $0x138] sm:$0xff]
        %v250 = vld [vmem:[#allocation5 + $0x140] sm:$0xff]
        %v251 = vld [vmem:[#allocation5 + $0x148] sm:$0xff]
        %v252 = vld [vmem:[#allocation5 + $0x150] sm:$0xff]
        %v253 = vld [vmem:[#allocation5 + $0x158] sm:$0xff]
        %v254 = vld [vmem:[#allocation5 + $0x160] sm:$0xff]
        %v255 = vld [vmem:[#allocation5 + $0x168] sm:$0xff]
        %v256 = vld [vmem:[#allocation5 + $0x170] sm:$0xff]
        %v257 = vld [vmem:[#allocation5 + $0x178] sm:$0xff]
        %v258 = vld [vmem:[#allocation5 + $0x180] sm:$0xff]
        %v259 = vld [vmem:[#allocation5 + $0x188] sm:$0xff]
        %v260 = vld [vmem:[#allocation5 + $0x190] sm:$0xff]
        %v261 = vld [vmem:[#allocation5 + $0x198] sm:$0xff]
        %v262 = vld [vmem:[#allocation5 + $0x1a0] sm:$0xff]
        %v263 = vld [vmem:[#allocation5 + $0x1a8] sm:$0xff]
        %v264 = vld [vmem:[#allocation5 + $0x1b0] sm:$0xff]
        %v265 = vld [vmem:[#allocation5 + $0x1b8] sm:$0xff]
        %v266 = vld [vmem:[#allocation5 + $0x1c0] sm:$0xff]
        %v267 = vld [vmem:[#allocation5 + $0x1c8] sm:$0xff]
        %v268 = vld [vmem:[#allocation5 + $0x1d0] sm:$0xff]
        %v269 = vld [vmem:[#allocation5 + $0x1d8] sm:$0xff]
        %v270 = vld [vmem:[#allocation5 + $0x1e0] sm:$0xff]
        %v271 = vld [vmem:[#allocation5 + $0x1e8] sm:$0xff]
        %v272 = vld [vmem:[#allocation5 + $0x1f0] sm:$0xff]
        %v273 = vld [vmem:[#allocation5 + $0x1f8] sm:$0xff]
        %v274 = vld [vmem:[#allocation5 + $0x200] sm:$0xff]
        %v275 = vld [vmem:[#allocation5 + $0x208] sm:$0xff]
        %v276 = vld [vmem:[#allocation5 + $0x210] sm:$0xff]
        %v277 = vld [vmem:[#allocation5 + $0x218] sm:$0xff]
        %v278 = vld [vmem:[#allocation5 + $0x220] sm:$0xff]
        %v279 = vld [vmem:[#allocation5 + $0x228] sm:$0xff]
        %v280 = vld [vmem:[#allocation5 + $0x230] sm:$0xff]
        %v281 = vld [vmem:[#allocation5 + $0x238] sm:$0xff]
        %v282 = vld [vmem:[#allocation5 + $0x240] sm:$0xff]
        %v283 = vld [vmem:[#allocation5 + $0x248] sm:$0xff]
        %v284 = vld [vmem:[#allocation5 + $0x250] sm:$0xff]
        %v285 = vld [vmem:[#allocation5 + $0x258] sm:$0xff]
        %v286 = vld [vmem:[#allocation5 + $0x260] sm:$0xff]
        %v287 = vld [vmem:[#allocation5 + $0x268] sm:$0xff]
        %v288 = vld [vmem:[#allocation5 + $0x270] sm:$0xff]
        %v289 = vld [vmem:[#allocation5 + $0x278] sm:$0xff]
        %v290 = vld [vmem:[#allocation5 + $0x280] sm:$0xff]
        %v291 = vld [vmem:[#allocation5 + $0x288] sm:$0xff]
        %v292 = vld [vmem:[#allocation5 + $0x290] sm:$0xff]
        %v293 = vld [vmem:[#allocation5 + $0x298] sm:$0xff]
        %v294 = vld [vmem:[#allocation5 + $0x2a0] sm:$0xff]
        %v295 = vld [vmem:[#allocation5 + $0x2a8] sm:$0xff]
        %v296 = vld [vmem:[#allocation5 + $0x2b0] sm:$0xff]
        %v297 = vld [vmem:[#allocation5 + $0x2b8] sm:$0xff]
        %v298 = vld [vmem:[#allocation5 + $0x2c0] sm:$0xff]
        %v299 = vld [vmem:[#allocation5 + $0x2c8] sm:$0xff]
        %v300 = vld [vmem:[#allocation5 + $0x2d0] sm:$0xff]
        %v301 = vld [vmem:[#allocation5 + $0x2d8] sm:$0xff]
        %v302 = vld [vmem:[#allocation5 + $0x2e0] sm:$0xff]
        %v303 = vld [vmem:[#allocation5 + $0x2e8] sm:$0xff]
        %v304 = vld [vmem:[#allocation5 + $0x2f0] sm:$0xff]
        %v305 = vld [vmem:[#allocation5 + $0x2f8] sm:$0xff]
        %v306 = vld [vmem:[#allocation5 + $0x300] sm:$0xff]
        %v307 = vld [vmem:[#allocation5 + $0x308] sm:$0xff]
        %v308 = vld [vmem:[#allocation5 + $0x310] sm:$0xff]
        %v309 = vld [vmem:[#allocation5 + $0x318] sm:$0xff]
        %v310 = vld [vmem:[#allocation5 + $0x320] sm:$0xff]
        %v311 = vld [vmem:[#allocation5 + $0x328] sm:$0xff]
        %v312 = vld [vmem:[#allocation5 + $0x330] sm:$0xff]
        %v313 = vld [vmem:[#allocation5 + $0x338] sm:$0xff]
        %v314 = vld [vmem:[#allocation5 + $0x340] sm:$0xff]
        %v315 = vld [vmem:[#allocation5 + $0x348] sm:$0xff]
        %v316 = vld [vmem:[#allocation5 + $0x350] sm:$0xff]
        %v317 = vld [vmem:[#allocation5 + $0x358] sm:$0xff]
        %v318 = vld [vmem:[#allocation5 + $0x360] sm:$0xff]
        %v319 = vld [vmem:[#allocation5 + $0x368] sm:$0xff]
        %v320 = vld [vmem:[#allocation5 + $0x370] sm:$0xff]
        %v321 = vld [vmem:[#allocation5 + $0x378] sm:$0xff]
        %v322 = vld [vmem:[#allocation5 + $0x380] sm:$0xff]
        %v323 = vld [vmem:[#allocation5 + $0x388] sm:$0xff]
        %v324 = vld [vmem:[#allocation5 + $0x390] sm:$0xff]
        %v325 = vld [vmem:[#allocation5 + $0x398] sm:$0xff]
        %v326 = vld [vmem:[#allocation5 + $0x3a0] sm:$0xff]
        %v327 = vld [vmem:[#allocation5 + $0x3a8] sm:$0xff]
        %v328 = vld [vmem:[#allocation5 + $0x3b0] sm:$0xff]
        %v329 = vld [vmem:[#allocation5 + $0x3b8] sm:$0xff]
        %v330 = vld [vmem:[#allocation5 + $0x3c0] sm:$0xff]
        %v331 = vld [vmem:[#allocation5 + $0x3c8] sm:$0xff]
        %v332 = vld [vmem:[#allocation5 + $0x3d0] sm:$0xff]
        %v333 = vld [vmem:[#allocation5 + $0x3d8] sm:$0xff]
        %v334 = vld [vmem:[#allocation5 + $0x3e0] sm:$0xff]
        %v335 = vld [vmem:[#allocation5 + $0x3e8] sm:$0xff]
        %v336 = vld [vmem:[#allocation5 + $0x3f0] sm:$0xff]
        %v337 = vld [vmem:[#allocation5 + $0x3f8] sm:$0xff]
        %338 = vmatprep.subr.mxu0 %v275
        %339 = vmatpush1.msra.mxu0 %v274
        %340 = vmatprep.subr.mxu0 %v277
        %341 = vmatpush1.msra.mxu0 %v276
        %342 = vmatprep.subr.mxu0 %v279
        %343 = vmatpush1.msra.mxu0 %v278
        %344 = vmatprep.subr.mxu0 %v281
        %345 = vmatpush1.msra.mxu0 %v280
        %346 = vmatprep.subr.mxu0 %v283
        %347 = vmatpush1.msra.mxu0 %v282
        %348 = vmatprep.subr.mxu0 %v285
        %349 = vmatpush1.msra.mxu0 %v284
        %350 = vmatprep.subr.mxu0 %v287
        %351 = vmatpush1.msra.mxu0 %v286
        %352 = vmatprep.subr.mxu0 %v289
        %353 = vmatpush1.msra.mxu0 %v288
        %354 = vmatprep.subr.mxu0 %v291
        %355 = vmatpush1.msra.mxu0 %v290
        %356 = vmatprep.subr.mxu0 %v293
        %357 = vmatpush1.msra.mxu0 %v292
        %358 = vmatprep.subr.mxu0 %v295
        %359 = vmatpush1.msra.mxu0 %v294
        %360 = vmatprep.subr.mxu0 %v297
        %361 = vmatpush1.msra.mxu0 %v296
        %362 = vmatprep.subr.mxu0 %v299
        %363 = vmatpush1.msra.mxu0 %v298
        %364 = vmatprep.subr.mxu0 %v301
        %365 = vmatpush1.msra.mxu0 %v300
        %366 = vmatprep.subr.mxu0 %v303
        %367 = vmatpush1.msra.mxu0 %v302
        %368 = vmatprep.subr.mxu0 %v305
        %369 = vmatpush1.msra.mxu0 %v304
        %370 = vmatprep.subr.mxu0 %v307
        %371 = vmatpush1.msra.mxu0 %v306
        %372 = vmatprep.subr.mxu0 %v309
        %373 = vmatpush1.msra.mxu0 %v308
        %374 = vmatprep.subr.mxu0 %v311
        %375 = vmatpush1.msra.mxu0 %v310
        %376 = vmatprep.subr.mxu0 %v313
        %377 = vmatpush1.msra.mxu0 %v312
        %378 = vmatprep.subr.mxu0 %v315
        %379 = vmatpush1.msra.mxu0 %v314
        %380 = vmatprep.subr.mxu0 %v317
        %381 = vmatpush1.msra.mxu0 %v316
        %382 = vmatprep.subr.mxu0 %v319
        %383 = vmatpush1.msra.mxu0 %v318
        %384 = vmatprep.subr.mxu0 %v321
        %385 = vmatpush1.msra.mxu0 %v320
        %386 = vmatprep.subr.mxu0 %v323
        %387 = vmatpush1.msra.mxu0 %v322
        %388 = vmatprep.subr.mxu0 %v325
        %389 = vmatpush1.msra.mxu0 %v324
        %390 = vmatprep.subr.mxu0 %v327
        %391 = vmatpush1.msra.mxu0 %v326
        %392 = vmatprep.subr.mxu0 %v329
        %393 = vmatpush1.msra.mxu0 %v328
        %394 = vmatprep.subr.mxu0 %v331
        %395 = vmatpush1.msra.mxu0 %v330
        %396 = vmatprep.subr.mxu0 %v333
        %397 = vmatpush1.msra.mxu0 %v332
        %398 = vmatprep.subr.mxu0 %v335
        %399 = vmatpush1.msra.mxu0 %v334
        %400 = vmatprep.subr.mxu0 %v337
        %401 = vmatpush1.msra.mxu0 %v336
        %402 = vmatprep.mubr.f32.mxu0 %v209
        %403 = vmatmul.mubr.f32.gmra.mrb[0].mxu0 %v208
        %v404 = vpop.f32.mrb[0].mxu0
        %v405 = vadd.f32 0.0, %v404
        %v406 = vpop.f32.mrb[0].mxu0
        %v407 = vadd.f32 0.0, %v406
        %408 = vdwg.mxu0
        %409 = vmatprep.subr.mxu0 %v211
        %410 = vmatpush1.msra.mxu0 %v210
        %411 = vmatprep.subr.mxu0 %v213
        %412 = vmatpush1.msra.mxu0 %v212
        %413 = vmatprep.subr.mxu0 %v215
        %414 = vmatpush1.msra.mxu0 %v214
        %415 = vmatprep.subr.mxu0 %v217
        %416 = vmatpush1.msra.mxu0 %v216
        %417 = vmatprep.subr.mxu0 %v219
        %418 = vmatpush1.msra.mxu0 %v218
        %419 = vmatprep.subr.mxu0 %v221
        %420 = vmatpush1.msra.mxu0 %v220
        %421 = vmatprep.subr.mxu0 %v223
        %422 = vmatpush1.msra.mxu0 %v222
        %423 = vmatprep.subr.mxu0 %v225
        %424 = vmatpush1.msra.mxu0 %v224
        %425 = vmatprep.subr.mxu0 %v227
        %426 = vmatpush1.msra.mxu0 %v226
        %427 = vmatprep.subr.mxu0 %v229
        %428 = vmatpush1.msra.mxu0 %v228
        %429 = vmatprep.subr.mxu0 %v231
        %430 = vmatpush1.msra.mxu0 %v230
        %431 = vmatprep.subr.mxu0 %v233
        %432 = vmatpush1.msra.mxu0 %v232
        %433 = vmatprep.subr.mxu0 %v235
        %434 = vmatpush1.msra.mxu0 %v234
        %435 = vmatprep.subr.mxu0 %v237
        %436 = vmatpush1.msra.mxu0 %v236
        %437 = vmatprep.subr.mxu0 %v239
        %438 = vmatpush1.msra.mxu0 %v238
        %439 = vmatprep.subr.mxu0 %v241
        %440 = vmatpush1.msra.mxu0 %v240
        %441 = vmatprep.subr.mxu0 %v243
        %442 = vmatpush1.msra.mxu0 %v242
        %443 = vmatprep.subr.mxu0 %v245
        %444 = vmatpush1.msra.mxu0 %v244
        %445 = vmatprep.subr.mxu0 %v247
        %446 = vmatpush1.msra.mxu0 %v246
        %447 = vmatprep.subr.mxu0 %v249
        %448 = vmatpush1.msra.mxu0 %v248
        %449 = vmatprep.subr.mxu0 %v251
        %450 = vmatpush1.msra.mxu0 %v250
        %451 = vmatprep.subr.mxu0 %v253
        %452 = vmatpush1.msra.mxu0 %v252
        %453 = vmatprep.subr.mxu0 %v255
        %454 = vmatpush1.msra.mxu0 %v254
        %455 = vmatprep.subr.mxu0 %v257
        %456 = vmatpush1.msra.mxu0 %v256
        %457 = vmatprep.subr.mxu0 %v259
        %458 = vmatpush1.msra.mxu0 %v258
        %459 = vmatprep.subr.mxu0 %v261
        %460 = vmatpush1.msra.mxu0 %v260
        %461 = vmatprep.subr.mxu0 %v263
        %462 = vmatpush1.msra.mxu0 %v262
        %463 = vmatprep.subr.mxu0 %v265
        %464 = vmatpush1.msra.mxu0 %v264
        %465 = vmatprep.subr.mxu0 %v267
        %466 = vmatpush1.msra.mxu0 %v266
        %467 = vmatprep.subr.mxu0 %v269
        %468 = vmatpush1.msra.mxu0 %v268
        %469 = vmatprep.subr.mxu0 %v271
        %470 = vmatpush1.msra.mxu0 %v270
        %471 = vmatprep.subr.mxu0 %v273
        %472 = vmatpush1.msra.mxu0 %v272
        %473 = vmatprep.mubr.f32.mxu0 %v193
        %474 = vmatmul.mubr.f32.gmra.mrb[0].mxu0 %v186
        %v475 = vpop.f32.mrb[0].mxu0
        %v476 = vadd.f32 %v405, %v475
        %v477 = vpop.f32.mrb[0].mxu0
        %v478 = vadd.f32 %v407, %v477
        %479 = vdwg.mxu0
        %v480 = vsub.f32 0.0, %v476
        %v481 = vsub.f32 0.0, %v478
        %v482 = vmul.f32 %v480, 1.442695
        %v483 = vpow.pop %v482
        %v484 = vmul.f32 %v481, 1.442695
        %v485 = vpow.pop %v484
        %v486 = vadd.f32 %v483, 1.0
        %v487 = vadd.f32 %v485, 1.0
        %v488 = vrcp.pop %v486
        %v489 = vrcp.pop %v487
        %v490 = vlaneseq
        %v491 = vshrl.u32 %v490, 7
        %v492 = vsub.s32 0, %v491
        %v493 = vrot.slane %v488, %v492
        %v494 = vlaneseq
        %v495 = vshrl.u32 %v494, 7
        %v496 = vsub.s32 0, %v495
        %v497 = vrot.slane %v489, %v496
        %v500 = vcombine.low %v493, %v497
        %v502 = vmul.f32 %v175, %v500
        %503 = vst [vmem:[%s174] sm:$0xff] %v502
        %s504 = sand.u32 %s75, 1
        %s505 = scalar_lea.sflag [#allocation4], %s504
        %s506 = sand.u32 %s75, 1
        %s507 = smul.addr %s506, 8
        %s508 = scalar_lea.vmem [#allocation7], %s507
        // Predicated region
        $region37: #{tpu_custom_call.1} parent=27 // pred_check
          %p509 = pneg %p85
        $region38: #{tpu_custom_call.1} parent=27 // pred_check_branch
          %511 = sbr.rel (%p509) target = $region40
        $region39: #{tpu_custom_call.1} parent=27 // pred_region
          %s513 = ssub.s32 128, 128
          %514 = vsyncadd %s505, %s513
          %s515 = smul.addr %s20, 2
          %s516 = smul.addr %s515, 64
          %s517 = scalar_lea.hbm %s2, %s516
          %s519 = sshll.u32 %s508, 4
          %s520 = int_to_ptr.vmem [resolvable:$true] %s519
          %522 = dma.vmem_to_hbm [thread:$0]  %s520, 128, %s517, %s505
        $region40: #{tpu_custom_call.1} parent=27 // pred_fallthru
          _
      $region28: #{tpu_custom_call.1} parent=5 // pred_fallthru
        _
      %p523 = scmp.le.s32.totalorder 2, %s15
      // Predicated region
      $region41: #{tpu_custom_call.1} parent=5 // pred_check
        %p524 = pneg %p523
      $region42: #{tpu_custom_call.1} parent=5 // pred_check_branch
        %526 = sbr.rel (%p524) target = $region44
      $region43: #{tpu_custom_call.1} parent=5 // pred_region
        %s527 = ssub.s32 %s15, 2
        // Predicated region
        $region45: #{tpu_custom_call.1} parent=43 // pred_check
          %p528 = pneg %p91
        $region46: #{tpu_custom_call.1} parent=43 // pred_check_branch
          %530 = sbr.rel (%p528) target = $region48
        $region47: #{tpu_custom_call.1} parent=43 // pred_region
          %s531 = sand.u32 %s76, 1
          %s532 = scalar_lea.sflag [#allocation4], %s531
          %s533 = sand.u32 %s76, 1
          %s534 = smul.addr %s533, 8
          %s535 = scalar_lea.vmem [#allocation7], %s534
          %536 = dma.done %s532, 128
        $region48: #{tpu_custom_call.1} parent=43 // pred_fallthru
          _
      $region44: #{tpu_custom_call.1} parent=5 // pred_fallthru
        _
    $region6: #{tpu_custom_call.1} parent=1 // loop_footer
      %s19 = sadd.s32 1, %s15
    $region7: #{tpu_custom_call.1} parent=1 // loop_footer_branch
      %14 = sbr.rel target = $region3
    $region8: #{tpu_custom_call.1} parent=1 // loop_exit
      _
    %537 = vsyncpa [#allocation3], 1
    %s538 = scalar_lea.sflag [#allocation3], 1
    %539 = vsyncpa %s538, 1
    %540 = vsyncpa [#allocation6], 1
    %541 = vsyncpa [#allocation4], 1
    %s542 = scalar_lea.sflag [#allocation4], 1
    %543 = vsyncpa %s542, 1

</llo_original>
